<compile_context>
chip_gen: v5e
topology: v5e:2x2
jax: 0.10.0
libtpu: 0.0.40
codegen_flags: <defaults>
</compile_context>

<pallas_src>
import functools

import jax
import jax.numpy as jnp
from jax.experimental import pallas as pl
from jax.experimental.pallas import tpu as pltpu

LANE = 128
SUBLANE = 8


def _round_up(x, m):
    return (x + m - 1) // m * m


def _vmem_limit_bytes():
    """Generation-aware VMEM budget: ~96 MiB on v5e/v6e (128 MiB phys), ~48 MiB on v7x (64 MiB)."""
    try:
        cap = int(pltpu.get_tpu_info().vmem_capacity_bytes)
    except Exception:  # conservative fallback if the query is unavailable
        cap = 64 * 1024 * 1024
    return max(32 * 1024 * 1024, (cap * 3) // 4)


def _pick_tile_m(n, word_dim, word_len, char_dim, d_pad, weight_bytes, vmem_limit,
                 cap=512):
    """Row-tile size: as large as VMEM comfortably allows, clamped to the data."""
    tile = min(cap, max(SUBLANE, _round_up(n, SUBLANE)))
    # Keep the ("parallel") row grid >= 2 for mid-sized inputs so both v7x
    # TensorCores get work instead of serializing onto one.
    if n > 2 * 128:
        tile = min(tile, max(128, _round_up(pl.cdiv(n, 2), SUBLANE)))

    def vmem_usage(t):
        # streamed tiles are double-buffered by the Pallas pipeline (f32)
        word_tile = t * _round_up(word_dim, LANE) * 4
        char_tile = t * _round_up(word_len, SUBLANE) * _round_up(char_dim, LANE) * 4
        out_tile = t * d_pad * 4
        streamed = 2 * (word_tile + char_tile + out_tile)
        working = 3 * 4 * t * (2 * d_pad)      # x / pre-activation / gate live values
        return streamed + working + weight_bytes

    while tile > 128 and vmem_usage(tile) > (vmem_limit * 7) // 10:
        tile //= 2
    return max(SUBLANE, min(tile, _round_up(n, SUBLANE)))


def _embedding_highway_kernel(word_ref, char_ref, w_ref, b_ref, o_ref):
    """Fused char max-pool + concat + zero-pad + Highway stack on one row tile.

    word_ref: (T, word_dim) f32            -- streamed rows
    char_ref: (T, word_len, char_dim) f32  -- streamed rows
    w_ref   : (L, D_pad, 2*D_pad) bf16/f32 -- [W_linear | W_gate], (in, out) layout, resident
    b_ref   : (L, 1, 2*D_pad) f32          -- [b_linear | b_gate], resident
    o_ref   : (T, D_pad) f32               -- lane-dense output tile
    """
    tile_m, d_pad = o_ref.shape

    # --- fused preprocessing: max over word-length axis, concat along lanes ---
    word = word_ref[...].astype(jnp.float32)                    # (T, word_dim)
    char = jnp.max(char_ref[...], axis=1).astype(jnp.float32)   # (T, char_dim)
    feat = word.shape[1] + char.shape[1]
    parts = [word, char]
    if d_pad > feat:
        parts.append(jnp.zeros((tile_m, d_pad - feat), jnp.float32))
    x = jnp.concatenate(parts, axis=-1)                          # (T, D_pad) f32
    # Padded lanes stay exactly 0 through the highway math (padded weight
    # cols/rows and biases are 0 -> lin=0, relu(0)=0, x_pad*(1-gate)=0).

    num_layers = w_ref.shape[0]
    compute_dtype = w_ref.dtype
    for i in range(num_layers):            # static unroll over highway layers
        # One MXU matmul per layer against the fused [W_linear | W_gate] RHS,
        # f32 accumulation; bias add / gating stay in f32.
        both = jnp.dot(x.astype(compute_dtype), w_ref[i],
                       preferred_element_type=jnp.float32) + b_ref[i]
        lin = both[:, :d_pad]                                    # lane-aligned slices
        gate = pl.reciprocal(1.0 + jnp.exp(-both[:, d_pad:]), approx=True)  # sigmoid
        x = gate * jnp.maximum(lin, 0.0) + (1.0 - gate) * x

    o_ref[...] = x.astype(o_ref.dtype)


@functools.partial(jax.jit, static_argnames=("tile_m", "vmem_limit"))
def _embedding_forward_impl(word2d, char3d, w, b, *, tile_m, vmem_limit):
    n, word_dim = word2d.shape
    _, word_len, char_dim = char3d.shape
    num_layers, d_pad, d2 = w.shape

    return pl.pallas_call(
        _embedding_highway_kernel,
        out_shape=jax.ShapeDtypeStruct((n, d_pad), jnp.float32),
        grid=(pl.cdiv(n, tile_m),),
        in_specs=[
            pl.BlockSpec((tile_m, word_dim), lambda i: (i, 0)),              # word rows
            pl.BlockSpec((tile_m, word_len, char_dim), lambda i: (i, 0, 0)),  # char rows
            pl.BlockSpec((num_layers, d_pad, d2), lambda i: (0, 0, 0)),       # resident W
            pl.BlockSpec((num_layers, 1, d2), lambda i: (0, 0, 0)),           # resident b
        ],
        out_specs=pl.BlockSpec((tile_m, d_pad), lambda i: (i, 0)),
        compiler_params=pltpu.CompilerParams(
            dimension_semantics=("parallel",),
            vmem_limit_bytes=int(vmem_limit),
        ),
    )(word2d, char3d, w, b)


def embedding_forward(word_emb, char_emb, params, *, tile_m=None):
    """word_emb: (B,S,word_dim); char_emb: (B,S,W,char_dim) -> (B,S,word+char)."""
    B, S, word_dim = word_emb.shape
    _, _, word_len, char_dim = char_emb.shape
    D = word_dim + char_dim

    w, b = params["w"], params["b"]
    L, d_pad, d2 = w.shape
    if d_pad != _round_up(D, LANE) or d2 != 2 * d_pad or b.shape != (L, 1, d2):
        raise ValueError(
            "params must be packed as w:(L, round_up(D,128), 2*round_up(D,128)), "
            "b:(L, 1, 2*round_up(D,128)) with zero padding")

    n = B * S
    word2d = word_emb.reshape(n, word_dim)            # metadata-only reshapes
    char3d = char_emb.reshape(n, word_len, char_dim)

    vmem_limit = _vmem_limit_bytes()
    weight_bytes = 2 * (w.size * w.dtype.itemsize + b.size * b.dtype.itemsize)
    if tile_m is None:
        tile_m = _pick_tile_m(n, word_dim, word_len, char_dim, d_pad,
                              weight_bytes, vmem_limit)

    out = _embedding_forward_impl(word2d, char3d, w, b,
                                  tile_m=int(tile_m), vmem_limit=int(vmem_limit))
    return out[:, :D].reshape(B, S, D)


def init_embedding_params(key, word_dim, char_dim, highway_layers,
                          weight_dtype=jnp.bfloat16):
    """nn.Linear-style params, pre-transposed to (in,out), fused [linear|gate] along
    the output axis, zero-padded to 128-lane multiples.
    Note: bf16 weight storage (f32 accumulation) is within the 2e-2 tolerance;
    pass weight_dtype=jnp.float32 for strict f32 parity at 2x resident VMEM."""
    dim = word_dim + char_dim
    d_pad = _round_up(dim, LANE)
    bound = dim ** -0.5
    keys = jax.random.split(key, 4 * highway_layers)

    ws, bs = [], []
    idx = 0
    for _ in range(highway_layers):
        wl = jax.random.uniform(keys[idx], (dim, dim), jnp.float32, -bound, bound); idx += 1
        bl = jax.random.uniform(keys[idx], (dim,), jnp.float32, -bound, bound); idx += 1
        wg = jax.random.uniform(keys[idx], (dim, dim), jnp.float32, -bound, bound); idx += 1
        bg = jax.random.uniform(keys[idx], (dim,), jnp.float32, -bound, bound); idx += 1
        w_full = (jnp.zeros((d_pad, 2 * d_pad), jnp.float32)
                  .at[:dim, :dim].set(wl)
                  .at[:dim, d_pad:d_pad + dim].set(wg))
        b_full = (jnp.zeros((1, 2 * d_pad), jnp.float32)
                  .at[0, :dim].set(bl)
                  .at[0, d_pad:d_pad + dim].set(bg))
        ws.append(w_full)
        bs.append(b_full)

    return {"w": jnp.stack(ws).astype(weight_dtype),   # (L, D_pad, 2*D_pad)
            "b": jnp.stack(bs)}                         # (L, 1, 2*D_pad) f32


def _reference(word_emb, char_emb, params, word_dim, char_dim):
    """Pure-JAX reference (f32) matching the PyTorch Embedding.forward."""
    D = word_dim + char_dim
    char_pooled = jnp.max(char_emb, axis=2)
    x = jnp.concatenate([word_emb, char_pooled], axis=-1).astype(jnp.float32)
    w = params["w"].astype(jnp.float32)
    b = params["b"]
    L, d_pad, _ = w.shape
    for i in range(L):
        lin = x @ w[i, :D, :D] + b[i, :, :D]
        gate = jax.nn.sigmoid(x @ w[i, :D, d_pad:d_pad + D] + b[i, :, d_pad:d_pad + D])
        x = gate * jnp.maximum(lin, 0.0) + (1.0 - gate) * x
    return x


if __name__ == "__main__":
    HIGHWAY_LAYERS = 2
    WORD_DIM = 32
    CHAR_DIM = 32
    BATCH, SEQ, WORD_LEN = 2, 8, 4

    key = jax.random.PRNGKey(0)
    k_w, k_c, k_p = jax.random.split(key, 3)
    word_emb = jax.random.normal(k_w, (BATCH, SEQ, WORD_DIM), dtype=jnp.float32)
    char_emb = jax.random.normal(k_c, (BATCH, SEQ, WORD_LEN, CHAR_DIM), dtype=jnp.float32)
    params = init_embedding_params(k_p, WORD_DIM, CHAR_DIM, HIGHWAY_LAYERS)

    out = embedding_forward(word_emb, char_emb, params)
    out = jax.block_until_ready(out)

    ref = _reference(word_emb, char_emb, params, WORD_DIM, CHAR_DIM)
    assert out.shape == (BATCH, SEQ, WORD_DIM + CHAR_DIM), out.shape
    max_err = float(jnp.max(jnp.abs(out - ref)))
    assert jnp.allclose(out, ref, atol=2e-2, rtol=2e-2), f"mismatch vs reference: {max_err}"

    print("KERNEL_OK")
</pallas_src>

<mosaic_0001>
module attributes {stable_mosaic.version = 11 : i64} {
  func.func @_embedding_highway_kernel(%arg0: i32, %arg1: memref<16x32xf32, #tpu.memory_space<vmem>>, %arg2: memref<16x4x32xf32, #tpu.memory_space<vmem>>, %arg3: memref<2x128x256xbf16, #tpu.memory_space<vmem>>, %arg4: memref<2x1x256xf32, #tpu.memory_space<vmem>>, %arg5: memref<16x128xf32, #tpu.memory_space<vmem>>) attributes {dimension_semantics = [#tpu.dimension_semantics<parallel>], iteration_bounds = array<i64: 1>, scalar_prefetch = 0 : i64, scratch_operands = 0 : i64, tpu.core_type = #tpu.core_type<tc>, window_params = [{transform_indices = @transform_0, window_bounds = array<i64: 16, 32>}, {transform_indices = @transform_1, window_bounds = array<i64: 16, 4, 32>}, {pipeline_mode = #tpu.pipeline_mode<synchronous>, transform_indices = @transform_2, window_bounds = array<i64: 2, 128, 256>}, {pipeline_mode = #tpu.pipeline_mode<synchronous>, transform_indices = @transform_3, window_bounds = array<i64: 2, 1, 256>}, {transform_indices = @transform_4, window_bounds = array<i64: 16, 128>}]} {
    %c0 = arith.constant 0 : index
    %c0_0 = arith.constant 0 : index
    %0 = vector.load %arg1[%c0, %c0_0] : memref<16x32xf32, #tpu.memory_space<vmem>>, vector<16x32xf32>
    %c0_1 = arith.constant 0 : index
    %c0_2 = arith.constant 0 : index
    %c0_3 = arith.constant 0 : index
    %1 = vector.load %arg2[%c0_1, %c0_2, %c0_3] : memref<16x4x32xf32, #tpu.memory_space<vmem>>, vector<16x4x32xf32>
    %cst = arith.constant dense<0xFF800000> : vector<16x32xf32>
    %2 = vector.multi_reduction <maximumf>, %1, %cst [1] : vector<16x4x32xf32> to vector<16x32xf32>
    %cst_4 = arith.constant 0.000000e+00 : f32
    %3 = vector.broadcast %cst_4 : f32 to vector<16x64xf32>
    %4 = tpu.concatenate %0, %2, %3 in 1 : vector<16x32xf32>, vector<16x32xf32>, vector<16x64xf32> -> vector<16x128xf32>
    %5 = arith.truncf %4 : vector<16x128xf32> to vector<16x128xbf16>
    %c0_5 = arith.constant 0 : index
    %c0_6 = arith.constant 0 : index
    %c0_7 = arith.constant 0 : index
    %6 = vector.load %arg3[%c0_5, %c0_6, %c0_7] : memref<2x128x256xbf16, #tpu.memory_space<vmem>>, vector<1x128x256xbf16>
    %7 = vector.shape_cast %6 : vector<1x128x256xbf16> to vector<128x256xbf16>
    %cst_8 = arith.constant dense<0.000000e+00> : vector<16x256xf32>
    %8 = tpu.matmul %5, %7, %cst_8 {dimension_numbers = #tpu.dot_dimension_numbers<[1], [0], [0], [1], [0, 0, 1, 1], [], []>} : vector<16x128xbf16>, vector<128x256xbf16>, vector<16x256xf32> -> vector<16x256xf32>
    %c0_9 = arith.constant 0 : index
    %c0_10 = arith.constant 0 : index
    %c0_11 = arith.constant 0 : index
    %9 = vector.load %arg4[%c0_9, %c0_10, %c0_11] : memref<2x1x256xf32, #tpu.memory_space<vmem>>, vector<1x1x256xf32>
    %10 = vector.shape_cast %9 : vector<1x1x256xf32> to vector<1x256xf32>
    %11 = vector.broadcast %10 : vector<1x256xf32> to vector<16x256xf32>
    %12 = arith.addf %8, %11 : vector<16x256xf32>
    %13 = vector.extract_strided_slice %12 {offsets = [0, 0], sizes = [16, 128], strides = [1, 1]} : vector<16x256xf32> to vector<16x128xf32>
    %14 = vector.extract_strided_slice %12 {offsets = [0, 128], sizes = [16, 128], strides = [1, 1]} : vector<16x256xf32> to vector<16x128xf32>
    %cst_12 = arith.constant 0.000000e+00 : f32
    %15 = vector.broadcast %cst_12 : f32 to vector<16x128xf32>
    %16 = arith.subf %15, %14 : vector<16x128xf32>
    %17 = math.exp %16 : vector<16x128xf32>
    %cst_13 = arith.constant 1.000000e+00 : f32
    %18 = vector.broadcast %cst_13 : f32 to vector<16x128xf32>
    %19 = arith.addf %18, %17 : vector<16x128xf32>
    %20 = tpu.reciprocal %19 {approx = true} : vector<16x128xf32> -> vector<16x128xf32>
    %cst_14 = arith.constant 0.000000e+00 : f32
    %21 = vector.broadcast %cst_14 : f32 to vector<16x128xf32>
    %22 = arith.maximumf %13, %21 : vector<16x128xf32>
    %23 = arith.mulf %20, %22 : vector<16x128xf32>
    %cst_15 = arith.constant 1.000000e+00 : f32
    %24 = vector.broadcast %cst_15 : f32 to vector<16x128xf32>
    %25 = arith.subf %24, %20 : vector<16x128xf32>
    %26 = arith.mulf %25, %4 : vector<16x128xf32>
    %27 = arith.addf %23, %26 : vector<16x128xf32>
    %28 = arith.truncf %27 : vector<16x128xf32> to vector<16x128xbf16>
    %c1 = arith.constant 1 : index
    %c0_16 = arith.constant 0 : index
    %c0_17 = arith.constant 0 : index
    %29 = vector.load %arg3[%c1, %c0_16, %c0_17] : memref<2x128x256xbf16, #tpu.memory_space<vmem>>, vector<1x128x256xbf16>
    %30 = vector.shape_cast %29 : vector<1x128x256xbf16> to vector<128x256xbf16>
    %cst_18 = arith.constant dense<0.000000e+00> : vector<16x256xf32>
    %31 = tpu.matmul %28, %30, %cst_18 {dimension_numbers = #tpu.dot_dimension_numbers<[1], [0], [0], [1], [0, 0, 1, 1], [], []>} : vector<16x128xbf16>, vector<128x256xbf16>, vector<16x256xf32> -> vector<16x256xf32>
    %c1_19 = arith.constant 1 : index
    %c0_20 = arith.constant 0 : index
    %c0_21 = arith.constant 0 : index
    %32 = vector.load %arg4[%c1_19, %c0_20, %c0_21] : memref<2x1x256xf32, #tpu.memory_space<vmem>>, vector<1x1x256xf32>
    %33 = vector.shape_cast %32 : vector<1x1x256xf32> to vector<1x256xf32>
    %34 = vector.broadcast %33 : vector<1x256xf32> to vector<16x256xf32>
    %35 = arith.addf %31, %34 : vector<16x256xf32>
    %36 = vector.extract_strided_slice %35 {offsets = [0, 0], sizes = [16, 128], strides = [1, 1]} : vector<16x256xf32> to vector<16x128xf32>
    %37 = vector.extract_strided_slice %35 {offsets = [0, 128], sizes = [16, 128], strides = [1, 1]} : vector<16x256xf32> to vector<16x128xf32>
    %cst_22 = arith.constant 0.000000e+00 : f32
    %38 = vector.broadcast %cst_22 : f32 to vector<16x128xf32>
    %39 = arith.subf %38, %37 : vector<16x128xf32>
    %40 = math.exp %39 : vector<16x128xf32>
    %cst_23 = arith.constant 1.000000e+00 : f32
    %41 = vector.broadcast %cst_23 : f32 to vector<16x128xf32>
    %42 = arith.addf %41, %40 : vector<16x128xf32>
    %43 = tpu.reciprocal %42 {approx = true} : vector<16x128xf32> -> vector<16x128xf32>
    %cst_24 = arith.constant 0.000000e+00 : f32
    %44 = vector.broadcast %cst_24 : f32 to vector<16x128xf32>
    %45 = arith.maximumf %36, %44 : vector<16x128xf32>
    %46 = arith.mulf %43, %45 : vector<16x128xf32>
    %cst_25 = arith.constant 1.000000e+00 : f32
    %47 = vector.broadcast %cst_25 : f32 to vector<16x128xf32>
    %48 = arith.subf %47, %43 : vector<16x128xf32>
    %49 = arith.mulf %48, %27 : vector<16x128xf32>
    %50 = arith.addf %46, %49 : vector<16x128xf32>
    %c0_26 = arith.constant 0 : index
    %c0_27 = arith.constant 0 : index
    %51 = vector.load %arg5[%c0_26, %c0_27] : memref<16x128xf32, #tpu.memory_space<vmem>>, vector<16x128xf32>
    tpu.vector_store %arg5[%c0_26, %c0_27], %50 {strides = array<i32>} : memref<16x128xf32, #tpu.memory_space<vmem>>, vector<16x128xf32>,
    return
  }
  func.func @transform_0(%arg0: i32) -> (i32, i32) {
    %c0_i32 = arith.constant 0 : i32
    %c0_i32_0 = arith.constant 0 : i32
    return %arg0, %c0_i32 : i32, i32
  }
  func.func @transform_1(%arg0: i32) -> (i32, i32, i32) {
    %c0_i32 = arith.constant 0 : i32
    %c0_i32_0 = arith.constant 0 : i32
    %c0_i32_1 = arith.constant 0 : i32
    return %arg0, %c0_i32, %c0_i32_0 : i32, i32, i32
  }
  func.func @transform_2(%arg0: i32) -> (i32, i32, i32) {
    %c0_i32 = arith.constant 0 : i32
    %c0_i32_0 = arith.constant 0 : i32
    %c0_i32_1 = arith.constant 0 : i32
    %c0_i32_2 = arith.constant 0 : i32
    return %c0_i32, %c0_i32_0, %c0_i32_1 : i32, i32, i32
  }
  func.func @transform_3(%arg0: i32) -> (i32, i32, i32) {
    %c0_i32 = arith.constant 0 : i32
    %c0_i32_0 = arith.constant 0 : i32
    %c0_i32_1 = arith.constant 0 : i32
    %c0_i32_2 = arith.constant 0 : i32
    return %c0_i32, %c0_i32_0, %c0_i32_1 : i32, i32, i32
  }
  func.func @transform_4(%arg0: i32) -> (i32, i32) {
    %c0_i32 = arith.constant 0 : i32
    %c0_i32_0 = arith.constant 0 : i32
    return %arg0, %c0_i32 : i32, i32
  }
}

</mosaic_0001>

<llo_original>
// kernel: _embedding_forward_impl.1
$region0: #{_embedding_forward_impl.1}
  #allocation0 [shape = 'u32[]', space=smem, size = 0x4, offset = 0x4, fixed_abs, tag = 'smem constant byte address 0x4 - core index']
  #allocation1 [shape = 'u32[72,128]{1,0:T(1,128)}', space=vmem, size = 0x9000, scoped, tag = 'internal scratch']
  %s0 = inlined_call_operand.hbm [shape: f32[16,32], index: 0, kind: input, shape index: {}]
  %s1 = inlined_call_operand.hbm [shape: f32[16,4,32], index: 1, kind: input, shape index: {}]
  %s2 = inlined_call_operand.hbm [shape: bf16[2,128,256], index: 2, kind: input, shape index: {}]
  %s3 = inlined_call_operand.hbm [shape: f32[2,1,256], index: 3, kind: input, shape index: {}]
  %s4 = inlined_call_operand.hbm [shape: f32[16,128], index: 4, kind: output, shape index: {}]
  %s5 = sld [smem:[#allocation0]]
  $region42: #{_embedding_forward_impl.1} parent=0
    _
  %s7 = ssub.s32 1, %s5
  %s8 = scalar_select 0, %s7, %s5
  $region1: #{_embedding_forward_impl.1} parent=0
    #allocation2 [shape = 'u8[8192]{0}', space=vmem, size = 0x2000, scoped, tag = 'input window, operand 0, single buffered']
    #allocation3 [shape = 's32[1]{0}', space=sflag, size = 0x4, scoped, tag = 'scoped memory for _embedding_forward_impl.1']
    #allocation4 [shape = 's32[1]{0}', space=sflag, size = 0x4, scoped, tag = 'scoped memory for _embedding_forward_impl.1']
    #allocation5 [shape = 'u8[32768]{0}', space=vmem, size = 0x8000, scoped, tag = 'input window, operand 1, single buffered']
    #allocation6 [shape = 's32[1]{0}', space=sflag, size = 0x4, scoped, tag = 'scoped memory for _embedding_forward_impl.1']
    #allocation7 [shape = 'u8[131072]{0}', space=vmem, size = 0x20000, scoped, tag = 'input window, operand 2, single buffered']
    #allocation8 [shape = 'u8[2048]{0}', space=vmem, size = 0x800, scoped, tag = 'input window, operand 3, single buffered']
    #allocation9 [shape = 's32[1]{0}', space=sflag, size = 0x4, scoped, tag = 'scoped memory for _embedding_forward_impl.1']
    #allocation10 [shape = 'u8[8192]{0}', space=vmem, size = 0x2000, scoped, tag = 'output window, operand 0, single buffered']
    %9 = vsyncpa [#allocation3], 0
    %10 = vsyncpa [#allocation6], 0
    %11 = vsyncpa [#allocation9], 0
    %12 = vsyncpa [#allocation4], 0
    // Predicated region
    $region2: #{_embedding_forward_impl.1} parent=1 // pred_check
      _
    $region3: #{_embedding_forward_impl.1} parent=1 // pred_check_branch
      %14 = sbr.rel (0) target = $region5
    $region4: #{_embedding_forward_impl.1} parent=1 // pred_region
      %16 = vsyncadd [#allocation3], 0
      %s17 = sshll.u32 %s0, 4
      %s18 = int_to_ptr.hbm [resolvable:$true] %s17
      %s19 = sshll.u32 [#allocation2], 4
      %s20 = int_to_ptr.vmem [resolvable:$true] %s19
      %25 = dma.hbm_to_vmem [thread:$0]  %s18, 256, %s20, [#allocation3], 128, 128, 8
    $region5: #{_embedding_forward_impl.1} parent=1 // pred_fallthru
      _
    // Predicated region
    $region6: #{_embedding_forward_impl.1} parent=1 // pred_check
      _
    $region7: #{_embedding_forward_impl.1} parent=1 // pred_check_branch
      %27 = sbr.rel (0) target = $region9
    $region8: #{_embedding_forward_impl.1} parent=1 // pred_region
      %29 = vsyncadd [#allocation6], 0
      %s30 = sshll.u32 %s1, 4
      %s31 = int_to_ptr.hbm [resolvable:$true] %s30
      %s32 = sshll.u32 [#allocation5], 4
      %s33 = int_to_ptr.vmem [resolvable:$true] %s32
      %38 = dma.hbm_to_vmem [thread:$0]  %s31, 1024, %s33, [#allocation6], 64, 64, 4
    $region9: #{_embedding_forward_impl.1} parent=1 // pred_fallthru
      _
    // Predicated region
    $region10: #{_embedding_forward_impl.1} parent=1 // pred_check
      _
    $region11: #{_embedding_forward_impl.1} parent=1 // pred_check_branch
      %40 = sbr.rel (0) target = $region13
    $region12: #{_embedding_forward_impl.1} parent=1 // pred_region
      %42 = vsyncadd [#allocation6], 0
      %s43 = sshll.u32 %s2, 4
      %s44 = int_to_ptr.hbm [resolvable:$true] %s43
      %s45 = sshll.u32 [#allocation7], 4
      %s46 = int_to_ptr.vmem [resolvable:$true] %s45
      %51 = dma.hbm_to_vmem [thread:$0]  %s44, 4096, %s46, [#allocation6], 128, 128, 8
    $region13: #{_embedding_forward_impl.1} parent=1 // pred_fallthru
      _
    // Predicated region
    $region14: #{_embedding_forward_impl.1} parent=1 // pred_check
      _
    $region15: #{_embedding_forward_impl.1} parent=1 // pred_check_branch
      %53 = sbr.rel (0) target = $region17
    $region16: #{_embedding_forward_impl.1} parent=1 // pred_region
      %55 = vsyncadd [#allocation9], 0
      %s56 = sshll.u32 %s3, 4
      %s57 = int_to_ptr.hbm [resolvable:$true] %s56
      %s58 = sshll.u32 [#allocation8], 4
      %s59 = int_to_ptr.vmem [resolvable:$true] %s58
      %64 = dma.hbm_to_vmem [thread:$0]  %s57, 64, %s59, [#allocation9], 32, 32, 2
    $region17: #{_embedding_forward_impl.1} parent=1 // pred_fallthru
      _
    // Predicated region
    $region18: #{_embedding_forward_impl.1} parent=1 // pred_check
      _
    $region19: #{_embedding_forward_impl.1} parent=1 // pred_check_branch
      %66 = sbr.rel (0) target = $region21
    $region20: #{_embedding_forward_impl.1} parent=1 // pred_region
      %68 = dma.done [#allocation3], 256
    $region21: #{_embedding_forward_impl.1} parent=1 // pred_fallthru
      _
    // Predicated region
    $region22: #{_embedding_forward_impl.1} parent=1 // pred_check
      _
    $region23: #{_embedding_forward_impl.1} parent=1 // pred_check_branch
      %70 = sbr.rel (0) target = $region25
    $region24: #{_embedding_forward_impl.1} parent=1 // pred_region
      %72 = dma.done [#allocation6], 1024
    $region25: #{_embedding_forward_impl.1} parent=1 // pred_fallthru
      _
    // Predicated region
    $region26: #{_embedding_forward_impl.1} parent=1 // pred_check
      _
    $region27: #{_embedding_forward_impl.1} parent=1 // pred_check_branch
      %74 = sbr.rel (0) target = $region29
    $region28: #{_embedding_forward_impl.1} parent=1 // pred_region
      %76 = dma.done [#allocation6], 4096
    $region29: #{_embedding_forward_impl.1} parent=1 // pred_fallthru
      _
    // Predicated region
    $region30: #{_embedding_forward_impl.1} parent=1 // pred_check
      _
    $region31: #{_embedding_forward_impl.1} parent=1 // pred_check_branch
      %78 = sbr.rel (0) target = $region33
    $region32: #{_embedding_forward_impl.1} parent=1 // pred_region
      %80 = dma.done [#allocation9], 64
    $region33: #{_embedding_forward_impl.1} parent=1 // pred_fallthru
      _
    %v81 = vld [vmem:[#allocation2] sm:$0xff]
    %v82 = vld [vmem:[#allocation2 + $0x8] sm:$0xff]
    %v83 = vld [vmem:[#allocation5] sm:$0xf]
    %v84 = vld [vmem:[#allocation5 + $0x4] sm:$0xf]
    %v85 = vld [vmem:[#allocation5 + $0x8] sm:$0xf]
    %v86 = vld [vmem:[#allocation5 + $0xc] sm:$0xf]
    %v87 = vld [vmem:[#allocation5 + $0x10] sm:$0xf]
    %v88 = vld [vmem:[#allocation5 + $0x14] sm:$0xf]
    %v89 = vld [vmem:[#allocation5 + $0x18] sm:$0xf]
    %v90 = vld [vmem:[#allocation5 + $0x1c] sm:$0xf]
    %v91 = vld [vmem:[#allocation5 + $0x20] sm:$0xf]
    %v92 = vld [vmem:[#allocation5 + $0x24] sm:$0xf]
    %v93 = vld [vmem:[#allocation5 + $0x28] sm:$0xf]
    %v94 = vld [vmem:[#allocation5 + $0x2c] sm:$0xf]
    %v95 = vld [vmem:[#allocation5 + $0x30] sm:$0xf]
    %v96 = vld [vmem:[#allocation5 + $0x34] sm:$0xf]
    %v97 = vld [vmem:[#allocation5 + $0x38] sm:$0xf]
    %v98 = vld [vmem:[#allocation5 + $0x3c] sm:$0xf]
    %vm99 = vcmask 257024
    %v100 = vsel %vm99, %v83, -inf
    %v101 = vrot.slane %v100, 4
    %v102 = vmax.f32 %v100, %v101
    %v103 = vrot.slane %v102, 2
    %v104 = vmax.f32 %v102, %v103
    %v105 = vrot.slane %v104, 1
    %v106 = vmax.f32 %v104, %v105
    %v107 = vsel %vm99, %v84, -inf
    %v108 = vrot.slane %v107, 4
    %v109 = vmax.f32 %v107, %v108
    %v110 = vrot.slane %v109, 2
    %v111 = vmax.f32 %v109, %v110
    %v112 = vrot.slane %v111, 1
    %v113 = vmax.f32 %v111, %v112
    %v114 = vsel %vm99, %v85, -inf
    %v115 = vrot.slane %v114, 4
    %v116 = vmax.f32 %v114, %v115
    %v117 = vrot.slane %v116, 2
    %v118 = vmax.f32 %v116, %v117
    %v119 = vrot.slane %v118, 1
    %v120 = vmax.f32 %v118, %v119
    %v121 = vsel %vm99, %v86, -inf
    %v122 = vrot.slane %v121, 4
    %v123 = vmax.f32 %v121, %v122
    %v124 = vrot.slane %v123, 2
    %v125 = vmax.f32 %v123, %v124
    %v126 = vrot.slane %v125, 1
    %v127 = vmax.f32 %v125, %v126
    %v128 = vsel %vm99, %v87, -inf
    %v129 = vrot.slane %v128, 4
    %v130 = vmax.f32 %v128, %v129
    %v131 = vrot.slane %v130, 2
    %v132 = vmax.f32 %v130, %v131
    %v133 = vrot.slane %v132, 1
    %v134 = vmax.f32 %v132, %v133
    %v135 = vsel %vm99, %v88, -inf
    %v136 = vrot.slane %v135, 4
    %v137 = vmax.f32 %v135, %v136
    %v138 = vrot.slane %v137, 2
    %v139 = vmax.f32 %v137, %v138
    %v140 = vrot.slane %v139, 1
    %v141 = vmax.f32 %v139, %v140
    %v142 = vsel %vm99, %v89, -inf
    %v143 = vrot.slane %v142, 4
    %v144 = vmax.f32 %v142, %v143
    %v145 = vrot.slane %v144, 2
    %v146 = vmax.f32 %v144, %v145
    %v147 = vrot.slane %v146, 1
    %v148 = vmax.f32 %v146, %v147
    %v149 = vsel %vm99, %v90, -inf
    %v150 = vrot.slane %v149, 4
    %v151 = vmax.f32 %v149, %v150
    %v152 = vrot.slane %v151, 2
    %v153 = vmax.f32 %v151, %v152
    %v154 = vrot.slane %v153, 1
    %v155 = vmax.f32 %v153, %v154
    %v156 = vsel %vm99, %v91, -inf
    %v157 = vrot.slane %v156, 4
    %v158 = vmax.f32 %v156, %v157
    %v159 = vrot.slane %v158, 2
    %v160 = vmax.f32 %v158, %v159
    %v161 = vrot.slane %v160, 1
    %v162 = vmax.f32 %v160, %v161
    %v163 = vsel %vm99, %v92, -inf
    %v164 = vrot.slane %v163, 4
    %v165 = vmax.f32 %v163, %v164
    %v166 = vrot.slane %v165, 2
    %v167 = vmax.f32 %v165, %v166
    %v168 = vrot.slane %v167, 1
    %v169 = vmax.f32 %v167, %v168
    %v170 = vsel %vm99, %v93, -inf
    %v171 = vrot.slane %v170, 4
    %v172 = vmax.f32 %v170, %v171
    %v173 = vrot.slane %v172, 2
    %v174 = vmax.f32 %v172, %v173
    %v175 = vrot.slane %v174, 1
    %v176 = vmax.f32 %v174, %v175
    %v177 = vsel %vm99, %v94, -inf
    %v178 = vrot.slane %v177, 4
    %v179 = vmax.f32 %v177, %v178
    %v180 = vrot.slane %v179, 2
    %v181 = vmax.f32 %v179, %v180
    %v182 = vrot.slane %v181, 1
    %v183 = vmax.f32 %v181, %v182
    %v184 = vsel %vm99, %v95, -inf
    %v185 = vrot.slane %v184, 4
    %v186 = vmax.f32 %v184, %v185
    %v187 = vrot.slane %v186, 2
    %v188 = vmax.f32 %v186, %v187
    %v189 = vrot.slane %v188, 1
    %v190 = vmax.f32 %v188, %v189
    %v191 = vsel %vm99, %v96, -inf
    %v192 = vrot.slane %v191, 4
    %v193 = vmax.f32 %v191, %v192
    %v194 = vrot.slane %v193, 2
    %v195 = vmax.f32 %v193, %v194
    %v196 = vrot.slane %v195, 1
    %v197 = vmax.f32 %v195, %v196
    %v198 = vsel %vm99, %v97, -inf
    %v199 = vrot.slane %v198, 4
    %v200 = vmax.f32 %v198, %v199
    %v201 = vrot.slane %v200, 2
    %v202 = vmax.f32 %v200, %v201
    %v203 = vrot.slane %v202, 1
    %v204 = vmax.f32 %v202, %v203
    %v205 = vsel %vm99, %v98, -inf
    %v206 = vrot.slane %v205, 4
    %v207 = vmax.f32 %v205, %v206
    %v208 = vrot.slane %v207, 2
    %v209 = vmax.f32 %v207, %v208
    %v210 = vrot.slane %v209, 1
    %v211 = vmax.f32 %v209, %v210
    %vm228 = vcmask 1041409
    %v229 = vsel %vm228, %v113, %v106
    %vm230 = vcmask 1042434
    %v231 = vsel %vm230, %v120, %v229
    %vm232 = vcmask 1043459
    %v233 = vsel %vm232, %v127, %v231
    %vm234 = vcmask 1044484
    %v235 = vsel %vm234, %v134, %v233
    %vm236 = vcmask 1045509
    %v237 = vsel %vm236, %v141, %v235
    %vm238 = vcmask 1046534
    %v239 = vsel %vm238, %v148, %v237
    %vm240 = vcmask 1047559
    %v241 = vsel %vm240, %v155, %v239
    %v242 = vsel %vm228, %v169, %v162
    %v243 = vsel %vm230, %v176, %v242
    %v244 = vsel %vm232, %v183, %v243
    %v245 = vsel %vm234, %v190, %v244
    %v246 = vsel %vm236, %v197, %v245
    %v247 = vsel %vm238, %v204, %v246
    %v248 = vsel %vm240, %v211, %v247
    %249 = vrot.lane.b32.xlu0 %v241, 32
    %v250 = vpop.permute.xlu0 %249
    %251 = vrot.lane.b32.xlu0 %v248, 32
    %v252 = vpop.permute.xlu0 %251
    %vm255 = vcmask 261120
    %v256 = vsel %vm255, %v81, %v250
    %v257 = vsel %vm255, %v82, %v252
    %vm258 = vcmask 523264
    %v259 = vsel %vm258, %v256, 0.0
    %v260 = vsel %vm258, %v257, 0.0
    %v261 = vpack.c.bf16 %v260, %v259
    %v262 = vld [vmem:[#allocation7] sm:$0xff]
    %v263 = vld [vmem:[#allocation7 + $0x8] sm:$0xff]
    %v264 = vld [vmem:[#allocation7 + $0x10] sm:$0xff]
    %v265 = vld [vmem:[#allocation7 + $0x18] sm:$0xff]
    %v266 = vld [vmem:[#allocation7 + $0x20] sm:$0xff]
    %v267 = vld [vmem:[#allocation7 + $0x28] sm:$0xff]
    %v268 = vld [vmem:[#allocation7 + $0x30] sm:$0xff]
    %v269 = vld [vmem:[#allocation7 + $0x38] sm:$0xff]
    %v270 = vld [vmem:[#allocation7 + $0x40] sm:$0xff]
    %v271 = vld [vmem:[#allocation7 + $0x48] sm:$0xff]
    %v272 = vld [vmem:[#allocation7 + $0x50] sm:$0xff]
    %v273 = vld [vmem:[#allocation7 + $0x58] sm:$0xff]
    %v274 = vld [vmem:[#allocation7 + $0x60] sm:$0xff]
    %v275 = vld [vmem:[#allocation7 + $0x68] sm:$0xff]
    %v276 = vld [vmem:[#allocation7 + $0x70] sm:$0xff]
    %v277 = vld [vmem:[#allocation7 + $0x78] sm:$0xff]
    %v278 = vld [vmem:[#allocation8] sm:$0x3]
    %v280 = vperm.slane %v278, 0
    %v281 = vperm.slane %v278, 1
    %v300 = vunpack.c.l.b16 %v262
    %v301 = vunpack.c.h.b16 %v262
    %v302 = vunpack.c.l.b16 %v263
    %v303 = vunpack.c.h.b16 %v263
    %v304 = vunpack.c.l.b16 %v264
    %v305 = vunpack.c.h.b16 %v264
    %v306 = vunpack.c.l.b16 %v265
    %v307 = vunpack.c.h.b16 %v265
    %v308 = vunpack.c.l.b16 %v266
    %v309 = vunpack.c.h.b16 %v266
    %v310 = vunpack.c.l.b16 %v267
    %v311 = vunpack.c.h.b16 %v267
    %v312 = vunpack.c.l.b16 %v268
    %v313 = vunpack.c.h.b16 %v268
    %v314 = vunpack.c.l.b16 %v269
    %v315 = vunpack.c.h.b16 %v269
    %v316 = vunpack.c.l.b16 %v270
    %v317 = vunpack.c.h.b16 %v270
    %v318 = vunpack.c.l.b16 %v271
    %v319 = vunpack.c.h.b16 %v271
    %v320 = vunpack.c.l.b16 %v272
    %v321 = vunpack.c.h.b16 %v272
    %v322 = vunpack.c.l.b16 %v273
    %v323 = vunpack.c.h.b16 %v273
    %v324 = vunpack.c.l.b16 %v274
    %v325 = vunpack.c.h.b16 %v274
    %v326 = vunpack.c.l.b16 %v275
    %v327 = vunpack.c.h.b16 %v275
    %v328 = vunpack.c.l.b16 %v276
    %v329 = vunpack.c.h.b16 %v276
    %v330 = vunpack.c.l.b16 %v277
    %v331 = vunpack.c.h.b16 %v277
    %v332 = vpack.c.b16 %v302, %v300
    %v333 = vpack.c.b16 %v303, %v301
    %v334 = vpack.c.b16 %v306, %v304
    %v335 = vpack.c.b16 %v307, %v305
    %v336 = vpack.c.b16 %v310, %v308
    %v337 = vpack.c.b16 %v311, %v309
    %v338 = vpack.c.b16 %v314, %v312
    %v339 = vpack.c.b16 %v315, %v313
    %v340 = vpack.c.b16 %v318, %v316
    %v341 = vpack.c.b16 %v319, %v317
    %v342 = vpack.c.b16 %v322, %v320
    %v343 = vpack.c.b16 %v323, %v321
    %v344 = vpack.c.b16 %v326, %v324
    %v345 = vpack.c.b16 %v327, %v325
    %v346 = vpack.c.b16 %v330, %v328
    %v347 = vpack.c.b16 %v331, %v329
    %364 = vmatpush.bf16.msra.mxu0 %v346
    %365 = vmatpush.bf16.msra.mxu0 %v344
    %366 = vmatpush.bf16.msra.mxu0 %v342
    %367 = vmatpush.bf16.msra.mxu0 %v340
    %368 = vmatpush.bf16.msra.mxu0 %v338
    %369 = vmatpush.bf16.msra.mxu0 %v336
    %370 = vmatpush.bf16.msra.mxu0 %v334
    %371 = vmatpush.bf16.msra.mxu0 %v332
    %372 = vmatmul.bf16.gmra.mxu0 %v261
    %v373 = vpop.f32.mrf.mxu0
    %v374 = vadd.f32 %v280, %v373
    %v375 = vpop.f32.mrf.mxu0
    %v376 = vadd.f32 %v280, %v375
    %377 = vdwg.mxu0
    %378 = vmatpush.bf16.msra.mxu0 %v347
    %379 = vmatpush.bf16.msra.mxu0 %v345
    %380 = vmatpush.bf16.msra.mxu0 %v343
    %381 = vmatpush.bf16.msra.mxu0 %v341
    %382 = vmatpush.bf16.msra.mxu0 %v339
    %383 = vmatpush.bf16.msra.mxu0 %v337
    %384 = vmatpush.bf16.msra.mxu0 %v335
    %385 = vmatpush.bf16.msra.mxu0 %v333
    %386 = vmatmul.bf16.gmra.mxu0 %v261
    %v387 = vpop.f32.mrf.mxu0
    %v388 = vadd.f32 %v281, %v387
    %v389 = vpop.f32.mrf.mxu0
    %v390 = vadd.f32 %v281, %v389
    %391 = vdwg.mxu0
    %v392 = vsub.f32 0.0, %v388
    %v393 = vsub.f32 0.0, %v390
    %v394 = vmul.f32 %v392, 1.442695
    %v395 = vpow.pop %v394
    %v396 = vmul.f32 %v393, 1.442695
    %v397 = vpow.pop %v396
    %v398 = vadd.f32 %v395, 1.0
    %v399 = vadd.f32 %v397, 1.0
    %v400 = vrcp.pop %v398
    %v401 = vrcp.pop %v399
    %v402 = vmax.f32 %v374, 0.0
    %v403 = vmax.f32 %v376, 0.0
    %v404 = vmul.f32 %v400, %v402
    %v405 = vmul.f32 %v401, %v403
    %v406 = vsub.f32 1.0, %v400
    %v407 = vsub.f32 1.0, %v401
    %v408 = vmul.f32 %v406, %v259
    %v409 = vmul.f32 %v407, %v260
    %v410 = vadd.f32 %v404, %v408
    %v411 = vadd.f32 %v405, %v409
    %v412 = vpack.c.bf16 %v411, %v410
    %s413 = scalar_lea.vmem [#allocation7], 128
    %v414 = vld [vmem:[%s413] sm:$0xff]
    %v415 = vld [vmem:[%s413 + $0x8] sm:$0xff]
    %v416 = vld [vmem:[%s413 + $0x10] sm:$0xff]
    %v417 = vld [vmem:[%s413 + $0x18] sm:$0xff]
    %v418 = vld [vmem:[%s413 + $0x20] sm:$0xff]
    %v419 = vld [vmem:[%s413 + $0x28] sm:$0xff]
    %v420 = vld [vmem:[%s413 + $0x30] sm:$0xff]
    %v421 = vld [vmem:[%s413 + $0x38] sm:$0xff]
    %v422 = vld [vmem:[%s413 + $0x40] sm:$0xff]
    %v423 = vld [vmem:[%s413 + $0x48] sm:$0xff]
    %v424 = vld [vmem:[%s413 + $0x50] sm:$0xff]
    %v425 = vld [vmem:[%s413 + $0x58] sm:$0xff]
    %v426 = vld [vmem:[%s413 + $0x60] sm:$0xff]
    %v427 = vld [vmem:[%s413 + $0x68] sm:$0xff]
    %v428 = vld [vmem:[%s413 + $0x70] sm:$0xff]
    %v429 = vld [vmem:[%s413 + $0x78] sm:$0xff]
    %s430 = scalar_lea.vmem [#allocation8], 2
    %v431 = vld [vmem:[%s430] sm:$0x3]
    %v433 = vperm.slane %v431, 0
    %v434 = vperm.slane %v431, 1
    %v453 = vunpack.c.l.b16 %v414
    %v454 = vunpack.c.h.b16 %v414
    %v455 = vunpack.c.l.b16 %v415
    %v456 = vunpack.c.h.b16 %v415
    %v457 = vunpack.c.l.b16 %v416
    %v458 = vunpack.c.h.b16 %v416
    %v459 = vunpack.c.l.b16 %v417
    %v460 = vunpack.c.h.b16 %v417
    %v461 = vunpack.c.l.b16 %v418
    %v462 = vunpack.c.h.b16 %v418
    %v463 = vunpack.c.l.b16 %v419
    %v464 = vunpack.c.h.b16 %v419
    %v465 = vunpack.c.l.b16 %v420
    %v466 = vunpack.c.h.b16 %v420
    %v467 = vunpack.c.l.b16 %v421
    %v468 = vunpack.c.h.b16 %v421
    %v469 = vunpack.c.l.b16 %v422
    %v470 = vunpack.c.h.b16 %v422
    %v471 = vunpack.c.l.b16 %v423
    %v472 = vunpack.c.h.b16 %v423
    %v473 = vunpack.c.l.b16 %v424
    %v474 = vunpack.c.h.b16 %v424
    %v475 = vunpack.c.l.b16 %v425
    %v476 = vunpack.c.h.b16 %v425
    %v477 = vunpack.c.l.b16 %v426
    %v478 = vunpack.c.h.b16 %v426
    %v479 = vunpack.c.l.b16 %v427
    %v480 = vunpack.c.h.b16 %v427
    %v481 = vunpack.c.l.b16 %v428
    %v482 = vunpack.c.h.b16 %v428
    %v483 = vunpack.c.l.b16 %v429
    %v484 = vunpack.c.h.b16 %v429
    %v485 = vpack.c.b16 %v455, %v453
    %v486 = vpack.c.b16 %v456, %v454
    %v487 = vpack.c.b16 %v459, %v457
    %v488 = vpack.c.b16 %v460, %v458
    %v489 = vpack.c.b16 %v463, %v461
    %v490 = vpack.c.b16 %v464, %v462
    %v491 = vpack.c.b16 %v467, %v465
    %v492 = vpack.c.b16 %v468, %v466
    %v493 = vpack.c.b16 %v471, %v469
    %v494 = vpack.c.b16 %v472, %v470
    %v495 = vpack.c.b16 %v475, %v473
    %v496 = vpack.c.b16 %v476, %v474
    %v497 = vpack.c.b16 %v479, %v477
    %v498 = vpack.c.b16 %v480, %v478
    %v499 = vpack.c.b16 %v483, %v481
    %v500 = vpack.c.b16 %v484, %v482
    %517 = vmatpush.bf16.msra.mxu0 %v499
    %518 = vmatpush.bf16.msra.mxu0 %v497
    %519 = vmatpush.bf16.msra.mxu0 %v495
    %520 = vmatpush.bf16.msra.mxu0 %v493
    %521 = vmatpush.bf16.msra.mxu0 %v491
    %522 = vmatpush.bf16.msra.mxu0 %v489
    %523 = vmatpush.bf16.msra.mxu0 %v487
    %524 = vmatpush.bf16.msra.mxu0 %v485
    %525 = vmatmul.bf16.gmra.mxu0 %v412
    %v526 = vpop.f32.mrf.mxu0
    %v527 = vadd.f32 %v433, %v526
    %v528 = vpop.f32.mrf.mxu0
    %v529 = vadd.f32 %v433, %v528
    %530 = vdwg.mxu0
    %531 = vmatpush.bf16.msra.mxu0 %v500
    %532 = vmatpush.bf16.msra.mxu0 %v498
    %533 = vmatpush.bf16.msra.mxu0 %v496
    %534 = vmatpush.bf16.msra.mxu0 %v494
    %535 = vmatpush.bf16.msra.mxu0 %v492
    %536 = vmatpush.bf16.msra.mxu0 %v490
    %537 = vmatpush.bf16.msra.mxu0 %v488
    %538 = vmatpush.bf16.msra.mxu0 %v486
    %539 = vmatmul.bf16.gmra.mxu0 %v412
    %v540 = vpop.f32.mrf.mxu0
    %v541 = vadd.f32 %v434, %v540
    %v542 = vpop.f32.mrf.mxu0
    %v543 = vadd.f32 %v434, %v542
    %544 = vdwg.mxu0
    %v545 = vsub.f32 0.0, %v541
    %v546 = vsub.f32 0.0, %v543
    %v547 = vmul.f32 %v545, 1.442695
    %v548 = vpow.pop %v547
    %v549 = vmul.f32 %v546, 1.442695
    %v550 = vpow.pop %v549
    %v551 = vadd.f32 %v548, 1.0
    %v552 = vadd.f32 %v550, 1.0
    %v553 = vrcp.pop %v551
    %v554 = vrcp.pop %v552
    %v555 = vmax.f32 %v527, 0.0
    %v556 = vmax.f32 %v529, 0.0
    %v557 = vmul.f32 %v553, %v555
    %v558 = vmul.f32 %v554, %v556
    %v559 = vsub.f32 1.0, %v553
    %v560 = vsub.f32 1.0, %v554
    %v561 = vmul.f32 %v559, %v410
    %v562 = vmul.f32 %v560, %v411
    %v563 = vadd.f32 %v557, %v561
    %v564 = vadd.f32 %v558, %v562
    %565 = vst [vmem:[#allocation10] sm:$0xff] %v563
    %566 = vst [vmem:[#allocation10 + $0x8] sm:$0xff] %v564
    // Predicated region
    $region34: #{_embedding_forward_impl.1} parent=1 // pred_check
      _
    $region35: #{_embedding_forward_impl.1} parent=1 // pred_check_branch
      %568 = sbr.rel (0) target = $region37
    $region36: #{_embedding_forward_impl.1} parent=1 // pred_region
      %570 = vsyncadd [#allocation4], 0
      %s571 = sshll.u32 [#allocation10], 4
      %s572 = int_to_ptr.vmem [resolvable:$true] %s571
      %s573 = sshll.u32 %s4, 4
      %s574 = int_to_ptr.hbm [resolvable:$true] %s573
      %579 = dma.vmem_to_hbm [thread:$0]  %s572, 256, %s574, [#allocation4], 128, 128, 8
    $region37: #{_embedding_forward_impl.1} parent=1 // pred_fallthru
      _
    // Predicated region
    $region38: #{_embedding_forward_impl.1} parent=1 // pred_check
      _
    $region39: #{_embedding_forward_impl.1} parent=1 // pred_check_branch
      %581 = sbr.rel (0) target = $region41
    $region40: #{_embedding_forward_impl.1} parent=1 // pred_region
      %583 = dma.done [#allocation4], 256
    $region41: #{_embedding_forward_impl.1} parent=1 // pred_fallthru
      _
    %584 = vsyncpa [#allocation3], 1
    %585 = vsyncpa [#allocation6], 1
    %586 = vsyncpa [#allocation9], 1
    %587 = vsyncpa [#allocation4], 1

</llo_original>
